<compile_context>
chip_gen: v7x
topology: tpu7x:2x2x1
jax: 0.10.0
libtpu: 0.0.40
codegen_flags: <defaults>
</compile_context>

<pallas_src>
import functools

import jax
import jax.numpy as jnp
from jax.experimental import pallas as pl
from jax.experimental.pallas import tpu as pltpu


def _cdiv(a, b):
    return -(-a // b)


def _round_up(a, m):
    return _cdiv(a, m) * m


def _conv1x1_kernel(x_ref, w_ref, o_ref):
    # x_ref: (1, C, T)  NCHW tile: channels on sublanes, H*W pixels on lanes
    # w_ref: (C, C)     resident weight (constant block index -> fetched once)
    # o_ref: (1, C, T)
    C = x_ref.shape[1]
    x = x_ref[0]          # (C, T)
    w = w_ref[...]        # (C, C)
    if C <= 8:
        # Tiny contraction dim: MXU would be <5% utilized, so do C broadcast
        # multiply-adds on the VPU over the lane-dense pixel axis (f32 accum).
        w32 = w.astype(jnp.float32)
        x32 = x.astype(jnp.float32)
        acc = w32[:, 0:1] * x32[0:1, :]
        for c in range(1, C):
            acc = acc + w32[:, c:c + 1] * x32[c:c + 1, :]
        z = acc
    else:
        z = jnp.dot(w, x, preferred_element_type=jnp.float32)
    o_ref[0] = z.astype(o_ref.dtype)


def _choose_tile_hw(HW, C, itemsize):
    """128-aligned pixel-tile size under a VMEM budget that accounts for the
    sublane padding of the C axis (C rows occupy round_up(C, pack) sublanes)."""
    pack = 8 * max(1, 4 // itemsize)              # f32 -> 8, bf16 -> 16, int8 -> 32
    padded_rows = _round_up(C, pack)
    max_buf_bytes = 1 << 20                       # ~1 MiB of *padded* VMEM per buffer
    bytes_per_col = padded_rows * itemsize
    max_tile = max(128, (max_buf_bytes // bytes_per_col) // 128 * 128)
    if HW <= max_tile:
        return HW                                 # single full-extent block (always legal)
    n_steps = _cdiv(HW, max_tile)
    return _round_up(_cdiv(HW, n_steps), 128)     # near-equal 128-aligned tiles


def _conv1x1_pallas(x3, w_mat):
    """x3: (N, C, HW); returns z3 with z3[n, :, t] = w_mat @ x3[n, :, t]."""
    N, C, HW = x3.shape
    itemsize = x3.dtype.itemsize
    tile_hw = _choose_tile_hw(HW, C, itemsize)
    grid = (N, _cdiv(HW, tile_hw))                # ragged last tile: writes are masked
    cost = pl.CostEstimate(
        flops=2 * N * HW * C * C,
        transcendentals=0,
        bytes_accessed=(2 * N * C * HW + C * C) * itemsize,
    )
    return pl.pallas_call(
        _conv1x1_kernel,
        out_shape=jax.ShapeDtypeStruct((N, C, HW), x3.dtype),
        grid_spec=pltpu.PrefetchScalarGridSpec(
            num_scalar_prefetch=0,
            grid=grid,
            in_specs=[
                pl.BlockSpec((1, C, tile_hw), lambda n, j: (n, 0, j)),
                pl.BlockSpec((C, C), lambda n, j: (0, 0)),
            ],
            out_specs=pl.BlockSpec((1, C, tile_hw), lambda n, j: (n, 0, j)),
        ),
        compiler_params=pltpu.CompilerParams(
            dimension_semantics=("parallel", "parallel"),
        ),
        cost_estimate=cost,
    )(x3, w_mat)


@functools.partial(jax.jit, static_argnames=("reverse",))
def invertible_conv1x1_forward(x, weight, logdet=None, reverse=False):
    """JAX/Pallas equivalent of InvertibleConv1x1.forward (LU_decomposed=False).

    x:      (N, C, H, W) float32
    weight: (C, C) float32
    Returns (z, logdet) with z of shape (N, C, H, W).
    """
    N, C, H, W = x.shape
    pixels = H * W

    # dlogdet = slogdet(W)[1] * pixels  (tiny CxC decomposition -> plain-JAX glue)
    _, logabsdet = jnp.linalg.slogdet(weight)
    dlogdet = logabsdet * pixels

    if not reverse:
        w_mat = weight
    else:
        # TODO(synk): PyTorch inverts in float64; jnp.linalg.inv here is float32
        # (enabling jax_enable_x64 would match exactly).
        w_mat = jnp.linalg.inv(weight)

    # Keep NCHW; H*W is already the fast (lane-friendly) axis.  No padding copy:
    # ragged pixel tiles are handled by Pallas' masked out-of-bounds writes.
    x3 = x.reshape(N, C, pixels)

    # Note: for bandwidth-bound cases on v6e/v7x, x3/w_mat could be cast to bf16
    # here (f32 accumulation in-kernel) to halve HBM traffic; kept f32 to match
    # the PyTorch reference numerics exactly.
    z3 = _conv1x1_pallas(x3, w_mat)

    z = z3.reshape(N, C, H, W)

    if logdet is not None:
        logdet = logdet + dlogdet if not reverse else logdet - dlogdet
    return z, logdet


def _make_weight(num_channels, key):
    # Deterministic replacement for np.linalg.qr(np.random.randn(C, C))[0]
    a = jax.random.normal(key, (num_channels, num_channels), dtype=jnp.float32)
    q, _ = jnp.linalg.qr(a)
    return q.astype(jnp.float32)


if __name__ == "__main__":
    key = jax.random.PRNGKey(0)
    k_w, k_x = jax.random.split(key)

    N, C, H, W = 2, 4, 16, 16
    weight = _make_weight(C, k_w)
    x = jax.random.normal(k_x, (N, C, H, W), dtype=jnp.float32)
    logdet0 = jnp.zeros((), dtype=jnp.float32)

    z, logdet = invertible_conv1x1_forward(x, weight, logdet=logdet0, reverse=False)
    z = jax.block_until_ready(z)
    logdet = jax.block_until_ready(logdet)

    # Reference check against plain-JAX einsum (same semantics as F.conv2d 1x1).
    z_ref = jnp.einsum("oc,nchw->nohw", weight, x)
    _, ref_lad = jnp.linalg.slogdet(weight)
    logdet_ref = logdet0 + ref_lad * (H * W)
    assert z.shape == (N, C, H, W)
    assert jnp.allclose(z, z_ref, atol=1e-5, rtol=1e-5), "mismatch vs reference"
    assert jnp.allclose(logdet, logdet_ref, atol=1e-4, rtol=1e-5), "logdet mismatch"

    # Reverse path: applying the inverse weight should recover x and undo logdet.
    x_rec, logdet_rt = invertible_conv1x1_forward(z, weight, logdet=logdet, reverse=True)
    x_rec = jax.block_until_ready(x_rec)
    assert jnp.allclose(x_rec, x, atol=1e-4, rtol=1e-4), "reverse reconstruction mismatch"
    assert jnp.allclose(logdet_rt, logdet0, atol=1e-4), "reverse logdet mismatch"

    print("KERNEL_OK")
</pallas_src>

<mosaic_0001>
module attributes {stable_mosaic.version = 11 : i64} {
  func.func @_conv1x1_kernel(%arg0: i32, %arg1: i32, %arg2: memref<1x4x256xf32, #tpu.memory_space<vmem>>, %arg3: memref<4x4xf32, #tpu.memory_space<vmem>>, %arg4: memref<1x4x256xf32, #tpu.memory_space<vmem>>) attributes {dimension_semantics = [#tpu.dimension_semantics<parallel>, #tpu.dimension_semantics<parallel>], iteration_bounds = array<i64: 2, 1>, scalar_prefetch = 0 : i64, scratch_operands = 0 : i64, tpu.core_type = #tpu.core_type<tc>, window_params = [{transform_indices = @transform_0, window_bounds = array<i64: 1, 4, 256>}, {pipeline_mode = #tpu.pipeline_mode<synchronous>, transform_indices = @transform_1, window_bounds = array<i64: 4, 4>}, {transform_indices = @transform_2, window_bounds = array<i64: 1, 4, 256>}]} {
    %c0 = arith.constant 0 : index
    %c0_0 = arith.constant 0 : index
    %c0_1 = arith.constant 0 : index
    %0 = vector.load %arg2[%c0, %c0_0, %c0_1] : memref<1x4x256xf32, #tpu.memory_space<vmem>>, vector<1x4x256xf32>
    %1 = vector.shape_cast %0 : vector<1x4x256xf32> to vector<4x256xf32>
    %c0_2 = arith.constant 0 : index
    %c0_3 = arith.constant 0 : index
    %2 = vector.load %arg3[%c0_2, %c0_3] : memref<4x4xf32, #tpu.memory_space<vmem>>, vector<4x4xf32>
    %3 = vector.extract_strided_slice %2 {offsets = [0, 0], sizes = [4, 1], strides = [1, 1]} : vector<4x4xf32> to vector<4x1xf32>
    %4 = vector.extract_strided_slice %1 {offsets = [0, 0], sizes = [1, 256], strides = [1, 1]} : vector<4x256xf32> to vector<1x256xf32>
    %5 = vector.broadcast %3 : vector<4x1xf32> to vector<4x256xf32>
    %6 = vector.broadcast %4 : vector<1x256xf32> to vector<4x256xf32>
    %7 = arith.mulf %5, %6 : vector<4x256xf32>
    %8 = vector.extract_strided_slice %2 {offsets = [0, 1], sizes = [4, 1], strides = [1, 1]} : vector<4x4xf32> to vector<4x1xf32>
    %9 = vector.extract_strided_slice %1 {offsets = [1, 0], sizes = [1, 256], strides = [1, 1]} : vector<4x256xf32> to vector<1x256xf32>
    %10 = vector.broadcast %8 : vector<4x1xf32> to vector<4x256xf32>
    %11 = vector.broadcast %9 : vector<1x256xf32> to vector<4x256xf32>
    %12 = arith.mulf %10, %11 : vector<4x256xf32>
    %13 = arith.addf %7, %12 : vector<4x256xf32>
    %14 = vector.extract_strided_slice %2 {offsets = [0, 2], sizes = [4, 1], strides = [1, 1]} : vector<4x4xf32> to vector<4x1xf32>
    %15 = vector.extract_strided_slice %1 {offsets = [2, 0], sizes = [1, 256], strides = [1, 1]} : vector<4x256xf32> to vector<1x256xf32>
    %16 = vector.broadcast %14 : vector<4x1xf32> to vector<4x256xf32>
    %17 = vector.broadcast %15 : vector<1x256xf32> to vector<4x256xf32>
    %18 = arith.mulf %16, %17 : vector<4x256xf32>
    %19 = arith.addf %13, %18 : vector<4x256xf32>
    %20 = vector.extract_strided_slice %2 {offsets = [0, 3], sizes = [4, 1], strides = [1, 1]} : vector<4x4xf32> to vector<4x1xf32>
    %21 = vector.extract_strided_slice %1 {offsets = [3, 0], sizes = [1, 256], strides = [1, 1]} : vector<4x256xf32> to vector<1x256xf32>
    %22 = vector.broadcast %20 : vector<4x1xf32> to vector<4x256xf32>
    %23 = vector.broadcast %21 : vector<1x256xf32> to vector<4x256xf32>
    %24 = arith.mulf %22, %23 : vector<4x256xf32>
    %25 = arith.addf %19, %24 : vector<4x256xf32>
    %c0_4 = arith.constant 0 : index
    %c0_5 = arith.constant 0 : index
    %c0_6 = arith.constant 0 : index
    %26 = vector.load %arg4[%c0_4, %c0_5, %c0_6] : memref<1x4x256xf32, #tpu.memory_space<vmem>>, vector<1x4x256xf32>
    %27 = vector.shape_cast %26 : vector<1x4x256xf32> to vector<4x256xf32>
    %28 = vector.shape_cast %25 : vector<4x256xf32> to vector<1x4x256xf32>
    tpu.vector_store %arg4[%c0_4, %c0_5, %c0_6], %28 {strides = array<i32>} : memref<1x4x256xf32, #tpu.memory_space<vmem>>, vector<1x4x256xf32>,
    return
  }
  func.func @transform_0(%arg0: i32, %arg1: i32) -> (i32, i32, i32) {
    %c0_i32 = arith.constant 0 : i32
    %c0_i32_0 = arith.constant 0 : i32
    return %arg0, %c0_i32, %arg1 : i32, i32, i32
  }
  func.func @transform_1(%arg0: i32, %arg1: i32) -> (i32, i32) {
    %c0_i32 = arith.constant 0 : i32
    %c0_i32_0 = arith.constant 0 : i32
    %c0_i32_1 = arith.constant 0 : i32
    return %c0_i32, %c0_i32_0 : i32, i32
  }
  func.func @transform_2(%arg0: i32, %arg1: i32) -> (i32, i32, i32) {
    %c0_i32 = arith.constant 0 : i32
    %c0_i32_0 = arith.constant 0 : i32
    return %arg0, %c0_i32, %arg1 : i32, i32, i32
  }
}

</mosaic_0001>

<llo_original>
// kernel: custom-call.2
$region0: #{custom-call.2}
  %s0 = inlined_call_operand.vmem [shape: f32[4,4], index: 0, kind: input, shape index: {}]
  %s1 = inlined_call_operand.vmem [shape: f32[4,4], index: 1, kind: output, shape index: {0}]
  %s2 = inlined_call_operand.hbm [shape: s32[4], index: 2, kind: output, shape index: {1}]
  %s3 = inlined_call_operand.hbm [shape: s32[4], index: 3, kind: output, shape index: {2}]
  %4 = xla_tuple %s1, %s2, %s3
  $region1: #{custom-call.2} parent=0
    #allocation0 [shape = 'u8[4096]{0}', space=vmem, size = 0x1000, scoped, tag = 'operand span for operand 0']
    #allocation1 [shape = 'u8[2048]{0}', space=vmem, size = 0x800, scoped, tag = 'packed  for operand 0']
    #allocation2 [shape = 'u8[4096]{0}', space=vmem, size = 0x1000, scoped, tag = 'operand span for operand 1']
    #allocation3 [shape = 'u8[2048]{0}', space=vmem, size = 0x800, scoped, tag = 'packed  for operand 1']
    #allocation4 [shape = 'u8[4096]{0}', space=vmem, size = 0x1000, scoped, tag = 'operand span for operand 2']
    #allocation5 [shape = 'u8[512]{0}', space=vmem, size = 0x400, scoped, tag = 'packed  for operand 2']
    #allocation6 [shape = 's32[1]{0}', space=sflag, size = 0x4, scoped, tag = 'scoped memory for custom-call.2']
    #allocation7 [shape = 'u8[4096]{0}', space=vmem, size = 0x1000, scoped, tag = 'operand span for operand 3']
    #allocation8 [shape = 'u8[512]{0}', space=vmem, size = 0x400, scoped, tag = 'packed  for operand 3']
    #allocation9 [shape = 's32[1]{0}', space=sflag, size = 0x4, scoped, tag = 'scoped memory for custom-call.2']
    #allocation10 [shape = 's32[4,128]{1,0}', space=vmem, size = 0x1000, scoped, tag = 'scratch for permutations']
    %5 = vsyncpa [#allocation6], 0
    %6 = vsyncpa [#allocation9], 0
    %p8 = scmp.gt.s32.totalorder 4, 0
    // Predicated region
    $region2: #{custom-call.2} parent=1 // pred_check
      %p9 = pneg %p8
    $region3: #{custom-call.2} parent=1 // pred_check_branch
      %11 = sbr.rel (%p9) target = $region5
    $region4: #{custom-call.2} parent=1 // pred_region
      %s12 = sshra.s32 4, 3
      %p13 = scmp.gt.s32.totalorder %s12, 0
      // Predicated region
      $region6: #{custom-call.2} parent=4 // pred_check
        %p14 = pneg %p13
      $region7: #{custom-call.2} parent=4 // pred_check_branch
        %16 = sbr.rel (%p14) target = $region9
      $region8: #{custom-call.2} parent=4 // pred_region
        %s17 = ssub.s32 %s12, 1
        %s18 = smul.u32 %s17, 128
        %s19 = sshra.s32 %s18, 4
        %s20 = scalar_lea.vmem %s0, %s19
        %v21 = vld [vmem:[%s0] sm:$0xff]
        // While loop
        $region10: #{custom-call.2} parent=8 // loop_pre_header
          _
        $region11: #{custom-call.2} parent=8 // loop_header
          %s22 = sphi %s0, %s44
          %s23 = sphi [#allocation1], %s45
          %v24 = vphi %v21, %v46
          %s25 = ssub.s32 %s20, 64
          %p26 = scmp.gt.s32.totalorder %s22, %s25
        $region12: #{custom-call.2} parent=8 // loop_header_branch
          %28 = sbr.rel (%p26) target = $region16
        $region13: #{custom-call.2} parent=8 // loop_body
          %29 = vst [vmem:[%s23] sm:$0xff] %v24
          %v30 = vld [vmem:[%s22 + $0x8] sm:$0xff]
          %31 = vst [vmem:[%s23 + $0x8] sm:$0xff] %v30
          %v32 = vld [vmem:[%s22 + $0x10] sm:$0xff]
          %33 = vst [vmem:[%s23 + $0x10] sm:$0xff] %v32
          %v34 = vld [vmem:[%s22 + $0x18] sm:$0xff]
          %35 = vst [vmem:[%s23 + $0x18] sm:$0xff] %v34
          %v36 = vld [vmem:[%s22 + $0x20] sm:$0xff]
          %37 = vst [vmem:[%s23 + $0x20] sm:$0xff] %v36
          %v38 = vld [vmem:[%s22 + $0x28] sm:$0xff]
          %39 = vst [vmem:[%s23 + $0x28] sm:$0xff] %v38
          %v40 = vld [vmem:[%s22 + $0x30] sm:$0xff]
          %41 = vst [vmem:[%s23 + $0x30] sm:$0xff] %v40
          %v42 = vld [vmem:[%s22 + $0x38] sm:$0xff]
          %43 = vst [vmem:[%s23 + $0x38] sm:$0xff] %v42
        $region14: #{custom-call.2} parent=8 // loop_footer
          %s44 = scalar_lea.vmem %s22, 64
          %s45 = scalar_lea.vmem %s23, 64
          %v46 = vld [vmem:[%s22 + $0x40] sm:$0xff]
        $region15: #{custom-call.2} parent=8 // loop_footer_branch
          %47 = sbr.rel target = $region11
        $region16: #{custom-call.2} parent=8 // loop_exit
          _
        // While loop
        $region17: #{custom-call.2} parent=8 // loop_pre_header
          _
        $region18: #{custom-call.2} parent=8 // loop_header
          %s48 = sphi %s22, %s56
          %s49 = sphi %s23, %s57
          %v50 = vphi %v24, %v50
          %p51 = scmp.gt.s32.totalorder %s48, %s20
        $region19: #{custom-call.2} parent=8 // loop_header_branch
          %53 = sbr.rel (%p51) target = $region23
        $region20: #{custom-call.2} parent=8 // loop_body
          %v54 = vld [vmem:[%s48] sm:$0xff]
          %55 = vst [vmem:[%s49] sm:$0xff] %v54
        $region21: #{custom-call.2} parent=8 // loop_footer
          %s56 = scalar_lea.vmem %s48, 8
          %s57 = scalar_lea.vmem %s49, 8
        $region22: #{custom-call.2} parent=8 // loop_footer_branch
          %58 = sbr.rel target = $region18
        $region23: #{custom-call.2} parent=8 // loop_exit
          _
      $region9: #{custom-call.2} parent=4 // pred_fallthru
        _
      %s59 = sand.u32 4, 7
      %s60 = sshllo.u32 0, %s59
      %s61 = smul.u32 %s12, 128
      %s62 = sshra.s32 %s61, 4
      %s63 = scalar_lea.vmem [#allocation1], %s62
      %s64 = smul.u32 %s12, 128
      %s65 = sshra.s32 %s64, 4
      %s66 = scalar_lea.vmem %s0, %s65
      %v67 = vld [vmem:[%s66] sm:%s60]
      %68 = vst [vmem:[%s63] sm:%s60] %v67
    $region5: #{custom-call.2} parent=1 // pred_fallthru
      _
    %s70 = sshllo.u32 0, 4
    %v71 = vld [vmem:[#allocation1] sm:%s70]
    %72 = vst [vmem:[#allocation0] sm:%s70] %v71
    %v73 = vld [vmem:[#allocation0] sm:$0xff]
    %74 = vst [vmem:[#allocation2] sm:$0xff] %v73
    %75 = vst [vmem:[#allocation4] sm:$0x1] 0
    %v76 = vlaneseq
    %v77 = vshrl.u32 %v76, 7
    %v78 = vmov %v77
    %80 = vst [vmem:[#allocation10] sm:$0xff] %v78
    loop: start=0, step=1, limit=4
    $region25: #{custom-call.2} parent=1 // loop_pre_header
      _
    $region26: #{custom-call.2} parent=1 // loop_header
      %s82 = sphi 0, %s86
      %p83 = scmp.ge.s32.totalorder %s82, 4
    $region27: #{custom-call.2} parent=1 // loop_header_branch
      %85 = sbr.rel (%p83) target = $region31
    $region28: #{custom-call.2} parent=1 // loop_body
      %v87 = vstv %s82
      %v88 = vlaneseq
      %v89 = vshrl.u32 %v88, 7
      %v90 = vmov %v89
      %v91 = vld [vmem:[#allocation2] sm:$0xff]
      %v92 = vand.u32 2147483647, %v91
      %v94 = vstv %s82
      %vm95 = vcmp.ge.s32.totalorder %v90, %v94
      %vm96 = vcmp.lt.s32.totalorder %v90, 4
      %vm97 = vmand %vm95, %vm96
      %vm98 = vcmp.lt.f32.partialorder -inf, %v92
      %vm99 = vmand %vm97, %vm98
      %v100 = vsel %vm99, %v90, %v87
      %v101 = vsel %vm99, %v92, -inf
      %v102 = vrot.slane %v101, 1
      %v103 = vrot.slane %v100, 1
      %vm104 = vcmp.ge.f32.partialorder %v102, %v101
      %v105 = vsel %vm104, %v102, %v101
      %v106 = vsel %vm104, %v103, %v100
      %v107 = vrot.slane %v102, 1
      %v108 = vrot.slane %v103, 1
      %vm109 = vcmp.ge.f32.partialorder %v107, %v105
      %v110 = vsel %vm109, %v107, %v105
      %v111 = vsel %vm109, %v108, %v106
      %v112 = vrot.slane %v107, 1
      %v113 = vrot.slane %v108, 1
      %vm114 = vcmp.ge.f32.partialorder %v112, %v110
      %v115 = vsel %vm114, %v112, %v110
      %v116 = vsel %vm114, %v113, %v111
      %v117 = vrot.slane %v112, 1
      %v118 = vrot.slane %v113, 1
      %vm119 = vcmp.ge.f32.partialorder %v117, %v115
      %v120 = vsel %vm119, %v117, %v115
      %v121 = vsel %vm119, %v118, %v116
      %v122 = vrot.slane %v117, 1
      %v123 = vrot.slane %v118, 1
      %vm124 = vcmp.ge.f32.partialorder %v122, %v120
      %v125 = vsel %vm124, %v122, %v120
      %v126 = vsel %vm124, %v123, %v121
      %v127 = vrot.slane %v122, 1
      %v128 = vrot.slane %v123, 1
      %vm129 = vcmp.ge.f32.partialorder %v127, %v125
      %v130 = vsel %vm129, %v127, %v125
      %v131 = vsel %vm129, %v128, %v126
      %v132 = vrot.slane %v127, 1
      %v133 = vrot.slane %v128, 1
      %vm134 = vcmp.ge.f32.partialorder %v132, %v130
      %v135 = vsel %vm134, %v132, %v130
      %v136 = vsel %vm134, %v133, %v131
      %s137 = ssub.s32 128, %s82
      %138 = vrot.lane.b32.xlu0 %v136, %s137
      %v139 = vpop.permute.xlu0 %138
      %s140 = vtos %v139
      %v141 = vstv %s82
      %v142 = vlaneseq
      %v143 = vand.u32 %v142, 127
      %vm144 = vcmp.eq.s32.totalorder %v143, %v141
      %v145 = vstv %s140
      %v146 = vld [vmem:[#allocation4] ss:$0 sm:$0xff]
      %v147 = vsel %vm144, %v145, %v146
      %148 = vst [vmem:[#allocation4] sm:$0x1] %v147
      %s149 = scalar_lea.vmem [#allocation2], %s82
      %s150 = scalar_lea.vmem [#allocation2], %s140
      %v151 = vld [vmem:[%s149] ss:$0 sm:$0xff]
      %v152 = vld [vmem:[%s150] ss:$0 sm:$0xff]
      %153 = vst [vmem:[%s150] sm:$0x1] %v151
      %154 = vst [vmem:[%s149] sm:$0x1] %v152
      %s155 = scalar_lea.vmem [#allocation10], %s82
      %s156 = scalar_lea.vmem [#allocation10], %s140
      %v157 = vld [vmem:[%s155] ss:$0 sm:$0xff]
      %v158 = vld [vmem:[%s156] ss:$0 sm:$0xff]
      %159 = vst [vmem:[%s156] sm:$0x1] %v157
      %160 = vst [vmem:[%s155] sm:$0x1] %v158
      %vm161 = vcmp.ne.f32.partialorder %v152, 0.0
      %vm162 = vmand %vm144, %vm161
      %v163 = vsel %vm162, %v152, 1.0
      %v164 = vlaneseq
      %v165 = vand.u32 %v164, 127
      %v166 = vstv %s82
      %vm167 = vcmp.gt.s32.totalorder %v165, %v166
      %v168 = vsel %vm167, %v152, 0.0
      %v169 = vlaneseq
      %v170 = vshrl.u32 %v169, 7
      %v171 = vmov %v170
      %v172 = vld [vmem:[#allocation2] sm:$0xff]
      %v174 = vstv %s82
      %vm175 = vcmp.gt.s32.totalorder %v171, %v174
      %v176 = vsel %vm175, %v163, 1.0
      %v177 = vrcp.pop %v176
      %v178 = vmul.f32 %v172, %v177
      %vm179 = vmand %vm175, %vm144
      %v180 = vsel %vm179, %v178, 0.0
      %181 = vadd.xlane.f32.xlu0 %v180
      %v182 = vpop.xlane.xlu0 %181
      %v183 = vmul.f32 %v182, %v168
      %v184 = vsub.f32 %v178, %v183
      %185 = vst [vmem:[#allocation2] sm:$0xff] %v184
    $region29: #{custom-call.2} parent=1 // loop_footer
      %s86 = sadd.s32 1, %s82
    $region30: #{custom-call.2} parent=1 // loop_footer_branch
      %81 = sbr.rel target = $region26
    $region31: #{custom-call.2} parent=1 // loop_exit
      _
    %v186 = vld [vmem:[#allocation10] sm:$0xff]
    %s187 = scalar_lea.vmem [#allocation10], 8
    %s188 = scalar_lea.vmem [#allocation10], 16
    %s189 = scalar_lea.vmem [#allocation10], 24
    %s190 = scalar_lea.vmem [#allocation10], 32
    %s191 = scalar_lea.vmem [#allocation10], 40
    %s192 = scalar_lea.vmem [#allocation10], 48
    %s193 = scalar_lea.vmem [#allocation10], 56
    %s194 = scalar_lea.vmem [#allocation10], 64
    %s195 = scalar_lea.vmem [#allocation10], 72
    %s196 = scalar_lea.vmem [#allocation10], 80
    %s197 = scalar_lea.vmem [#allocation10], 88
    %s198 = scalar_lea.vmem [#allocation10], 96
    %s199 = scalar_lea.vmem [#allocation10], 104
    %s200 = scalar_lea.vmem [#allocation10], 112
    %s201 = scalar_lea.vmem [#allocation10], 120
    %202 = vxpose.xlu0.b32.start [1/16] %v186, 128
    %203 = vxpose.xlu0.b32.cont [2/16] 0, 128
    %204 = vxpose.xlu0.b32.cont [3/16] 0, 128
    %205 = vxpose.xlu0.b32.cont [4/16] 0, 128
    %206 = vxpose.xlu0.b32.cont [5/16] 0, 128
    %207 = vxpose.xlu0.b32.cont [6/16] 0, 128
    %208 = vxpose.xlu0.b32.cont [7/16] 0, 128
    %209 = vxpose.xlu0.b32.cont [8/16] 0, 128
    %210 = vxpose.xlu0.b32.cont [9/16] 0, 128
    %211 = vxpose.xlu0.b32.cont [10/16] 0, 128
    %212 = vxpose.xlu0.b32.cont [11/16] 0, 128
    %213 = vxpose.xlu0.b32.cont [12/16] 0, 128
    %214 = vxpose.xlu0.b32.cont [13/16] 0, 128
    %215 = vxpose.xlu0.b32.cont [14/16] 0, 128
    %216 = vxpose.xlu0.b32.cont [15/16] 0, 128
    %217 = vxpose.xlu0.b32.end [16/16] 0, 128
    %v218 = vpop.trf.xlu0
    %v219 = vpop.trf.xlu0
    %v220 = vpop.trf.xlu0
    %v221 = vpop.trf.xlu0
    %v222 = vpop.trf.xlu0
    %v223 = vpop.trf.xlu0
    %v224 = vpop.trf.xlu0
    %v225 = vpop.trf.xlu0
    %v226 = vpop.trf.xlu0
    %v227 = vpop.trf.xlu0
    %v228 = vpop.trf.xlu0
    %v229 = vpop.trf.xlu0
    %v230 = vpop.trf.xlu0
    %v231 = vpop.trf.xlu0
    %v232 = vpop.trf.xlu0
    %v233 = vpop.trf.xlu0
    %234 = vst [vmem:[#allocation7] sm:$0x1] %v218
    %s236 = sshllo.u32 0, 4
    %v238 = vld [vmem:[#allocation2] sm:%s236]
    %s239 = sshllo.u32 0, 4
    %240 = vst [vmem:[#allocation3] sm:%s239] %v238
    %s242 = sshllo.u32 0, 1
    %v244 = vld [vmem:[#allocation4] sm:%s242]
    %s245 = sshllo.u32 0, 1
    %246 = vst [vmem:[#allocation5] sm:%s245] %v244
    %s248 = sshllo.u32 0, 1
    %v250 = vld [vmem:[#allocation7] sm:%s248]
    %s251 = sshllo.u32 0, 1
    %252 = vst [vmem:[#allocation8] sm:%s251] %v250
    %p254 = scmp.gt.s32.totalorder 4, 0
    // Predicated region
    $region32: #{custom-call.2} parent=1 // pred_check
      %p255 = pneg %p254
    $region33: #{custom-call.2} parent=1 // pred_check_branch
      %257 = sbr.rel (%p255) target = $region35
    $region34: #{custom-call.2} parent=1 // pred_region
      %s258 = sshra.s32 4, 3
      %p259 = scmp.gt.s32.totalorder %s258, 0
      // Predicated region
      $region36: #{custom-call.2} parent=34 // pred_check
        %p260 = pneg %p259
      $region37: #{custom-call.2} parent=34 // pred_check_branch
        %262 = sbr.rel (%p260) target = $region39
      $region38: #{custom-call.2} parent=34 // pred_region
        %s263 = ssub.s32 %s258, 1
        %s264 = smul.u32 %s263, 128
        %s265 = sshra.s32 %s264, 4
        %s266 = scalar_lea.vmem [#allocation3], %s265
        %v267 = vld [vmem:[#allocation3] sm:$0xff]
        // While loop
        $region40: #{custom-call.2} parent=38 // loop_pre_header
          _
        $region41: #{custom-call.2} parent=38 // loop_header
          %s268 = sphi [#allocation3], %s290
          %s269 = sphi %s1, %s291
          %v270 = vphi %v267, %v292
          %s271 = ssub.s32 %s266, 64
          %p272 = scmp.gt.s32.totalorder %s268, %s271
        $region42: #{custom-call.2} parent=38 // loop_header_branch
          %274 = sbr.rel (%p272) target = $region46
        $region43: #{custom-call.2} parent=38 // loop_body
          %275 = vst [vmem:[%s269] sm:$0xff] %v270
          %v276 = vld [vmem:[%s268 + $0x8] sm:$0xff]
          %277 = vst [vmem:[%s269 + $0x8] sm:$0xff] %v276
          %v278 = vld [vmem:[%s268 + $0x10] sm:$0xff]
          %279 = vst [vmem:[%s269 + $0x10] sm:$0xff] %v278
          %v280 = vld [vmem:[%s268 + $0x18] sm:$0xff]
          %281 = vst [vmem:[%s269 + $0x18] sm:$0xff] %v280
          %v282 = vld [vmem:[%s268 + $0x20] sm:$0xff]
          %283 = vst [vmem:[%s269 + $0x20] sm:$0xff] %v282
          %v284 = vld [vmem:[%s268 + $0x28] sm:$0xff]
          %285 = vst [vmem:[%s269 + $0x28] sm:$0xff] %v284
          %v286 = vld [vmem:[%s268 + $0x30] sm:$0xff]
          %287 = vst [vmem:[%s269 + $0x30] sm:$0xff] %v286
          %v288 = vld [vmem:[%s268 + $0x38] sm:$0xff]
          %289 = vst [vmem:[%s269 + $0x38] sm:$0xff] %v288
        $region44: #{custom-call.2} parent=38 // loop_footer
          %s290 = scalar_lea.vmem %s268, 64
          %s291 = scalar_lea.vmem %s269, 64
          %v292 = vld [vmem:[%s268 + $0x40] sm:$0xff]
        $region45: #{custom-call.2} parent=38 // loop_footer_branch
          %293 = sbr.rel target = $region41
        $region46: #{custom-call.2} parent=38 // loop_exit
          _
        // While loop
        $region47: #{custom-call.2} parent=38 // loop_pre_header
          _
        $region48: #{custom-call.2} parent=38 // loop_header
          %s294 = sphi %s268, %s302
          %s295 = sphi %s269, %s303
          %v296 = vphi %v270, %v296
          %p297 = scmp.gt.s32.totalorder %s294, %s266
        $region49: #{custom-call.2} parent=38 // loop_header_branch
          %299 = sbr.rel (%p297) target = $region53
        $region50: #{custom-call.2} parent=38 // loop_body
          %v300 = vld [vmem:[%s294] sm:$0xff]
          %301 = vst [vmem:[%s295] sm:$0xff] %v300
        $region51: #{custom-call.2} parent=38 // loop_footer
          %s302 = scalar_lea.vmem %s294, 8
          %s303 = scalar_lea.vmem %s295, 8
        $region52: #{custom-call.2} parent=38 // loop_footer_branch
          %304 = sbr.rel target = $region48
        $region53: #{custom-call.2} parent=38 // loop_exit
          _
      $region39: #{custom-call.2} parent=34 // pred_fallthru
        _
      %s305 = sand.u32 4, 7
      %s306 = sshllo.u32 0, %s305
      %s307 = smul.u32 %s258, 128
      %s308 = sshra.s32 %s307, 4
      %s309 = scalar_lea.vmem %s1, %s308
      %s310 = smul.u32 %s258, 128
      %s311 = sshra.s32 %s310, 4
      %s312 = scalar_lea.vmem [#allocation3], %s311
      %v313 = vld [vmem:[%s312] sm:%s306]
      %314 = vst [vmem:[%s309] sm:%s306] %v313
    $region35: #{custom-call.2} parent=1 // pred_fallthru
      _
    // Predicated region
    $region54: #{custom-call.2} parent=1 // pred_check
      _
    $region55: #{custom-call.2} parent=1 // pred_check_branch
      %316 = sbr.rel (0) target = $region57
    $region56: #{custom-call.2} parent=1 // pred_region
      %s318 = ssub.s32 16, 16
      %319 = vsyncadd [#allocation6], %s318
      %s320 = sshll.u32 [#allocation5], 4
      %s321 = int_to_ptr.vmem [resolvable:$true] %s320
      %323 = dma.vmem_to_hbm [thread:$0]  %s321, 16, %s2, [#allocation6]
    $region57: #{custom-call.2} parent=1 // pred_fallthru
      _
    // Predicated region
    $region58: #{custom-call.2} parent=1 // pred_check
      _
    $region59: #{custom-call.2} parent=1 // pred_check_branch
      %325 = sbr.rel (0) target = $region61
    $region60: #{custom-call.2} parent=1 // pred_region
      %s327 = ssub.s32 16, 16
      %328 = vsyncadd [#allocation9], %s327
      %s329 = sshll.u32 [#allocation8], 4
      %s330 = int_to_ptr.vmem [resolvable:$true] %s329
      %332 = dma.vmem_to_hbm [thread:$0]  %s330, 16, %s3, [#allocation9]
    $region61: #{custom-call.2} parent=1 // pred_fallthru
      _
    // Predicated region
    $region62: #{custom-call.2} parent=1 // pred_check
      _
    $region63: #{custom-call.2} parent=1 // pred_check_branch
      %334 = sbr.rel (0) target = $region65
    $region64: #{custom-call.2} parent=1 // pred_region
      %335 = dma.done [#allocation6], 16
    $region65: #{custom-call.2} parent=1 // pred_fallthru
      _
    // Predicated region
    $region66: #{custom-call.2} parent=1 // pred_check
      _
    $region67: #{custom-call.2} parent=1 // pred_check_branch
      %337 = sbr.rel (0) target = $region69
    $region68: #{custom-call.2} parent=1 // pred_region
      %338 = dma.done [#allocation9], 16
    $region69: #{custom-call.2} parent=1 // pred_fallthru
      _
    %339 = vsyncpa [#allocation6], 1
    %340 = vsyncpa [#allocation9], 1

// kernel: invertible_conv1x1_forward.1
$region0: #{invertible_conv1x1_forward.1}
  #allocation0 [shape = 'u32[]', space=smem, size = 0x4, offset = 0x4, fixed_abs, tag = 'smem constant byte address 0x4 - core index']
  #allocation1 [shape = 'u32[144,128]{1,0:T(1,128)}', space=vmem, size = 0x12000, scoped, tag = 'internal scratch']
  %s0 = inlined_call_operand.vmem [shape: f32[2,4,256], index: 0, kind: input, shape index: {}]
  %s1 = inlined_call_operand.vmem [shape: f32[4,4], index: 1, kind: input, shape index: {}]
  %s2 = inlined_call_operand.vmem [shape: f32[2,4,256], index: 2, kind: output, shape index: {}]
  %s3 = sld [smem:[#allocation0]]
  $region41: #{invertible_conv1x1_forward.1} parent=0
    _
  %s5 = ssub.s32 1, %s3
  %s6 = scalar_select 0, %s5, %s3
  loop: start=0, step=1, limit=4
  $region2: #{invertible_conv1x1_forward.1} parent=0 // loop_pre_header
    _
  $region3: #{invertible_conv1x1_forward.1} parent=0 // loop_header
    %s8 = sphi 0, %s12
    %p9 = scmp.ge.s32.totalorder %s8, 4
    %s15 = sphi 0, %s27
    %s16 = sphi 0, %s23
    %s17 = sphi 0, %s15
    %s18 = sphi 0, %s16
    %s19 = sphi 0, %s17
    %s20 = sphi 0, %s18
    %s32 = sphi 0, %s34
    %s35 = sphi 0, %s32
    %s36 = sphi 0, %s35
    %s52 = sphi 0, %s36
    %s56 = sphi 0, %s56
    %s58 = sphi 0, %s56
    %s59 = sphi 0, %s58
    %s73 = sphi 0, %s59
    %s81 = sphi 0, %s83
    %s84 = sphi 0, %s81
    %s85 = sphi 0, %s84
    %s101 = sphi 0, %s85
  $region4: #{invertible_conv1x1_forward.1} parent=0 // loop_header_branch
    %11 = sbr.rel (%p9) target = $region8
  $region5: #{invertible_conv1x1_forward.1} parent=0 // loop_body
    %s13 = ssub.s32 %s8, 1
    %s14 = ssub.s32 %s8, 2
    %s21 = sadd.s32 1, %s16
    %p22 = scmp.ge.s32.totalorder %s21, 1
    %s23 = scalar_select %p22, 0, %s21
    %s24 = sadd.s32 1, %s15
    %s25 = scalar_select %p22, %s24, %s15
    %p26 = scmp.ge.s32.totalorder %s25, 2
    %s27 = scalar_select %p26, 0, %s25
    %s28 = ssub.s32 %s15, %s27
    %s29 = ssub.s32 %s16, %s23
    %s30 = sor.u32 %s28, %s29
    %p31 = scmp.eq.s32.totalorder %s30, 0
    %s33 = sadd.s32 %s32, 1
    %s34 = scalar_select %p31, %s32, %s33
    %p37 = pneg %p31
    %p38 = scmp.eq.s32.totalorder %s8, 1
    %p39 = por %p37, %p38
    %p40 = scmp.ne.s32.totalorder %s32, %s35
    %p41 = scmp.eq.s32.totalorder %s8, 0
    %p42 = por %p40, %p41
    %p43 = scmp.ne.s32.totalorder %s32, %s35
    %p44 = scmp.eq.s32.totalorder %s13, 1
    %p45 = por %p43, %p44
    %p46 = scmp.ne.s32.totalorder %s35, %s36
    %p47 = scmp.eq.s32.totalorder %s13, 0
    %p48 = por %p46, %p47
    %p49 = scmp.ne.s32.totalorder %s35, %s36
    %p50 = scmp.eq.s32.totalorder %s14, 1
    %p51 = por %p49, %p50
    %p53 = scmp.ne.s32.totalorder %s36, %s52
    %p54 = scmp.eq.s32.totalorder %s14, 0
    %p55 = por %p53, %p54
    %s57 = sadd.s32 %s56, 1
    %p60 = scmp.eq.s32.totalorder %s8, 1
    %p61 = scmp.ne.s32.totalorder %s56, %s58
    %p62 = scmp.eq.s32.totalorder %s8, 0
    %p63 = por %p61, %p62
    %p64 = scmp.ne.s32.totalorder %s56, %s58
    %p65 = scmp.eq.s32.totalorder %s13, 1
    %p66 = por %p64, %p65
    %p67 = scmp.ne.s32.totalorder %s58, %s59
    %p68 = scmp.eq.s32.totalorder %s13, 0
    %p69 = por %p67, %p68
    %p70 = scmp.ne.s32.totalorder %s58, %s59
    %p71 = scmp.eq.s32.totalorder %s14, 1
    %p72 = por %p70, %p71
    %p74 = scmp.ne.s32.totalorder %s59, %s73
    %p75 = scmp.eq.s32.totalorder %s14, 0
    %p76 = por %p74, %p75
    %s77 = ssub.s32 %s15, %s27
    %s78 = ssub.s32 %s16, %s23
    %s79 = sor.u32 %s77, %s78
    %p80 = scmp.eq.s32.totalorder %s79, 0
    %s82 = sadd.s32 %s81, 1
    %s83 = scalar_select %p80, %s81, %s82
    %p86 = pneg %p80
    %p87 = scmp.eq.s32.totalorder %s8, 1
    %p88 = por %p86, %p87
    %p89 = scmp.ne.s32.totalorder %s81, %s84
    %p90 = scmp.eq.s32.totalorder %s8, 0
    %p91 = por %p89, %p90
    %p92 = scmp.ne.s32.totalorder %s81, %s84
    %p93 = scmp.eq.s32.totalorder %s13, 1
    %p94 = por %p92, %p93
    %p95 = scmp.ne.s32.totalorder %s84, %s85
    %p96 = scmp.eq.s32.totalorder %s13, 0
    %p97 = por %p95, %p96
    %p98 = scmp.ne.s32.totalorder %s84, %s85
    %p99 = scmp.eq.s32.totalorder %s14, 1
    %p100 = por %p98, %p99
    %p102 = scmp.ne.s32.totalorder %s85, %s101
    %p103 = scmp.eq.s32.totalorder %s14, 0
    %p104 = por %p102, %p103
    %p105 = scmp.le.s32.totalorder 1, %s8
    %p106 = scmp.lt.s32.totalorder %s8, 3
    %p107 = pnand %p105, %p106
    %p108 = pneg %p107
    // Predicated region
    $region9: #{invertible_conv1x1_forward.1} parent=5 // pred_check
      _
    $region10: #{invertible_conv1x1_forward.1} parent=5 // pred_check_branch
      %110 = sbr.rel (%p107) target = $region12
    $region11: #{invertible_conv1x1_forward.1} parent=5 // pred_region
      %s111 = ssub.s32 %s8, 1
      // Predicated region
      $region13: #{invertible_conv1x1_forward.1} parent=11 // pred_check
        %p112 = pneg %p69
      $region14: #{invertible_conv1x1_forward.1} parent=11 // pred_check_branch
        %114 = sbr.rel (%p112) target = $region16
      $region15: #{invertible_conv1x1_forward.1} parent=11 // pred_region
        _
      $region16: #{invertible_conv1x1_forward.1} parent=11 // pred_fallthru
        _
    $region12: #{invertible_conv1x1_forward.1} parent=5 // pred_fallthru
      _
    %p115 = scmp.lt.s32.totalorder %s8, 2
    // Predicated region
    $region17: #{invertible_conv1x1_forward.1} parent=5 // pred_check
      %p116 = pneg %p115
    $region18: #{invertible_conv1x1_forward.1} parent=5 // pred_check_branch
      %118 = sbr.rel (%p116) target = $region20
    $region19: #{invertible_conv1x1_forward.1} parent=5 // pred_region
      // Predicated region
      $region21: #{invertible_conv1x1_forward.1} parent=19 // pred_check
        %p119 = pneg %p42
      $region22: #{invertible_conv1x1_forward.1} parent=19 // pred_check_branch
        %121 = sbr.rel (%p119) target = $region24
      $region23: #{invertible_conv1x1_forward.1} parent=19 // pred_region
        %s122 = smul.u32 2, %s16
        %p123 = scmp.lt.s32.totalorder %s15, 1
        %s124 = scalar_select %p123, %s15, 1
        %p125 = scmp.lt.s32.totalorder %s122, 1
        %s126 = scalar_select %p125, %s122, 1
        %s127 = smul.addr %s124, 2
        %s128 = sadd.s32 %s126, %s127
        %s129 = smul.addr %s128, 4
        %s130 = scalar_lea.vmem %s0, %s129
        %s131 = smul.u32 2, %s16
      $region24: #{invertible_conv1x1_forward.1} parent=19 // pred_fallthru
        _
    $region20: #{invertible_conv1x1_forward.1} parent=5 // pred_fallthru
      _
    %p132 = scmp.le.s32.totalorder 1, %s8
    %p133 = scmp.lt.s32.totalorder %s8, 3
    %p134 = pnand %p132, %p133
    %p135 = pneg %p134
    // Predicated region
    $region25: #{invertible_conv1x1_forward.1} parent=5 // pred_check
      _
    $region26: #{invertible_conv1x1_forward.1} parent=5 // pred_check_branch
      %137 = sbr.rel (%p134) target = $region28
    $region27: #{invertible_conv1x1_forward.1} parent=5 // pred_region
      %s138 = ssub.s32 %s8, 1
      %s139 = smul.u32 2, %s18
      %p140 = scmp.lt.s32.totalorder %s17, 1
      %s141 = scalar_select %p140, %s17, 1
      %p142 = scmp.lt.s32.totalorder %s139, 1
      %s143 = scalar_select %p142, %s139, 1
      %s144 = smul.addr %s141, 2
      %s145 = sadd.s32 %s143, %s144
      %s146 = smul.addr %s145, 4
      %s147 = scalar_lea.vmem %s0, %s146
      %p148 = pneg %p48
      %p149 = pneg %p45
      %p150 = pneg %p69
      %p151 = pneg %p66
      %p152 = pneg %p97
      %p153 = pneg %p94
      %s154 = smul.u32 2, %s18
      %p155 = scmp.lt.s32.totalorder %s17, 1
      %s156 = scalar_select %p155, %s17, 1
      %p157 = scmp.lt.s32.totalorder %s154, 1
      %s158 = scalar_select %p157, %s154, 1
      %s159 = smul.addr %s156, 2
      %s160 = sadd.s32 %s158, %s159
      %s161 = smul.addr %s160, 4
      %s162 = scalar_lea.vmem %s2, %s161
      %s163 = smul.u32 2, %s18
      %p164 = scmp.lt.s32.totalorder %s17, 1
      %s165 = scalar_select %p164, %s17, 1
      %p166 = scmp.lt.s32.totalorder %s163, 1
      %s167 = scalar_select %p166, %s163, 1
      %s168 = smul.addr %s165, 2
      %s169 = sadd.s32 %s167, %s168
      %s170 = smul.addr %s169, 4
      %s171 = scalar_lea.vmem %s0, %s170
      %s172 = smul.u32 2, %s18
      %s173 = smul.u32 2, %s18
      %p174 = scmp.lt.s32.totalorder %s17, 1
      %s175 = scalar_select %p174, %s17, 1
      %p176 = scmp.lt.s32.totalorder %s173, 1
      %s177 = scalar_select %p176, %s173, 1
      %s178 = smul.addr %s175, 2
      %s179 = sadd.s32 %s177, %s178
      %s180 = smul.addr %s179, 4
      %s181 = scalar_lea.vmem %s2, %s180
      %s182 = smul.u32 2, %s18
      %v183 = vld [vmem:[%s171] sm:$0xff]
      %v184 = vld [vmem:[%s1] sm:$0xf]
      %186 = vset.pattern.permute.xlu0 0
      %187 = vperm.xlu0 %186, %v184
      %v188 = vpop.permute.xlu0 %187
      %v191 = vlaneseq
      %v192 = vshrl.u32 %v191, 7
      %v193 = vsub.s32 0, %v192
      %v194 = vrot.slane %v183, %v193
      %v195 = vlaneseq
      %v196 = vshrl.u32 %v195, 7
      %v197 = vsub.s32 4, %v196
      %v198 = vrot.slane %v183, %v197
      %v201 = vlaneseq
      %v202 = vshrl.u32 %v201, 7
      %v203 = vsub.s32 0, %v202
      %v204 = vrot.slane %v194, %v203
      %v205 = vlaneseq
      %v206 = vshrl.u32 %v205, 7
      %v207 = vsub.s32 0, %v206
      %v208 = vrot.slane %v198, %v207
      %v209 = vmul.f32 %v188, %v204
      %v210 = vmul.f32 %v188, %v208
      %211 = vset.pattern.permute.xlu0 1
      %212 = vperm.xlu0 %211, %v184
      %v213 = vpop.permute.xlu0 %212
      %v215 = vlaneseq
      %v216 = vshrl.u32 %v215, 7
      %v217 = vsub.s32 1, %v216
      %v218 = vrot.slane %v183, %v217
      %v219 = vlaneseq
      %v220 = vshrl.u32 %v219, 7
      %v221 = vsub.s32 5, %v220
      %v222 = vrot.slane %v183, %v221
      %v225 = vlaneseq
      %v226 = vshrl.u32 %v225, 7
      %v227 = vsub.s32 1, %v226
      %v228 = vrot.slane %v218, %v227
      %v229 = vlaneseq
      %v230 = vshrl.u32 %v229, 7
      %v231 = vsub.s32 1, %v230
      %v232 = vrot.slane %v222, %v231
      %v233 = vmul.f32 %v213, %v228
      %v234 = vmul.f32 %v213, %v232
      %v235 = vadd.f32 %v209, %v233
      %v236 = vadd.f32 %v210, %v234
      %237 = vset.pattern.permute.xlu0 2
      %238 = vperm.xlu0 %237, %v184
      %v239 = vpop.permute.xlu0 %238
      %v241 = vlaneseq
      %v242 = vshrl.u32 %v241, 7
      %v243 = vsub.s32 2, %v242
      %v244 = vrot.slane %v183, %v243
      %v245 = vlaneseq
      %v246 = vshrl.u32 %v245, 7
      %v247 = vsub.s32 6, %v246
      %v248 = vrot.slane %v183, %v247
      %v251 = vlaneseq
      %v252 = vshrl.u32 %v251, 7
      %v253 = vsub.s32 2, %v252
      %v254 = vrot.slane %v244, %v253
      %v255 = vlaneseq
      %v256 = vshrl.u32 %v255, 7
      %v257 = vsub.s32 2, %v256
      %v258 = vrot.slane %v248, %v257
      %v259 = vmul.f32 %v239, %v254
      %v260 = vmul.f32 %v239, %v258
      %v261 = vadd.f32 %v235, %v259
      %v262 = vadd.f32 %v236, %v260
      %263 = vset.pattern.permute.xlu0 3
      %264 = vperm.xlu0 %263, %v184
      %v265 = vpop.permute.xlu0 %264
      %v267 = vlaneseq
      %v268 = vshrl.u32 %v267, 7
      %v269 = vsub.s32 3, %v268
      %v270 = vrot.slane %v183, %v269
      %v271 = vlaneseq
      %v272 = vshrl.u32 %v271, 7
      %v273 = vsub.s32 7, %v272
      %v274 = vrot.slane %v183, %v273
      %v277 = vlaneseq
      %v278 = vshrl.u32 %v277, 7
      %v279 = vsub.s32 3, %v278
      %v280 = vrot.slane %v270, %v279
      %v281 = vlaneseq
      %v282 = vshrl.u32 %v281, 7
      %v283 = vsub.s32 3, %v282
      %v284 = vrot.slane %v274, %v283
      %v285 = vmul.f32 %v265, %v280
      %v286 = vmul.f32 %v265, %v284
      %v287 = vadd.f32 %v261, %v285
      %v288 = vadd.f32 %v262, %v286
      %v291 = vcombine.low %v287, %v288
      %293 = vst [vmem:[%s181] sm:$0xff] %v291
      %s294 = smul.u32 2, %s18
      %p295 = scmp.lt.s32.totalorder %s17, 1
      %s296 = scalar_select %p295, %s17, 1
      %p297 = scmp.lt.s32.totalorder %s294, 1
      %s298 = scalar_select %p297, %s294, 1
      %s299 = smul.addr %s296, 2
      %s300 = sadd.s32 %s298, %s299
      %s301 = smul.addr %s300, 4
      %s302 = scalar_lea.vmem %s2, %s301
      // Predicated region
      $region29: #{invertible_conv1x1_forward.1} parent=27 // pred_check
        %p303 = pneg %p94
      $region30: #{invertible_conv1x1_forward.1} parent=27 // pred_check_branch
        %305 = sbr.rel (%p303) target = $region32
      $region31: #{invertible_conv1x1_forward.1} parent=27 // pred_region
        %s306 = smul.u32 2, %s18
      $region32: #{invertible_conv1x1_forward.1} parent=27 // pred_fallthru
        _
    $region28: #{invertible_conv1x1_forward.1} parent=5 // pred_fallthru
      _
    %p307 = scmp.le.s32.totalorder 2, %s8
    // Predicated region
    $region33: #{invertible_conv1x1_forward.1} parent=5 // pred_check
      %p308 = pneg %p307
    $region34: #{invertible_conv1x1_forward.1} parent=5 // pred_check_branch
      %310 = sbr.rel (%p308) target = $region36
    $region35: #{invertible_conv1x1_forward.1} parent=5 // pred_region
      %s311 = ssub.s32 %s8, 2
      // Predicated region
      $region37: #{invertible_conv1x1_forward.1} parent=35 // pred_check
        %p312 = pneg %p100
      $region38: #{invertible_conv1x1_forward.1} parent=35 // pred_check_branch
        %314 = sbr.rel (%p312) target = $region40
      $region39: #{invertible_conv1x1_forward.1} parent=35 // pred_region
        %s315 = smul.u32 2, %s20
        %p316 = scmp.lt.s32.totalorder %s19, 1
        %s317 = scalar_select %p316, %s19, 1
        %p318 = scmp.lt.s32.totalorder %s315, 1
        %s319 = scalar_select %p318, %s315, 1
        %s320 = smul.addr %s317, 2
        %s321 = sadd.s32 %s319, %s320
        %s322 = smul.addr %s321, 4
        %s323 = scalar_lea.vmem %s2, %s322
      $region40: #{invertible_conv1x1_forward.1} parent=35 // pred_fallthru
        _
    $region36: #{invertible_conv1x1_forward.1} parent=5 // pred_fallthru
      _
  $region6: #{invertible_conv1x1_forward.1} parent=0 // loop_footer
    %s12 = sadd.s32 1, %s8
  $region7: #{invertible_conv1x1_forward.1} parent=0 // loop_footer_branch
    %7 = sbr.rel target = $region3
  $region8: #{invertible_conv1x1_forward.1} parent=0 // loop_exit
    _

</llo_original>
